<compile_context>
chip_gen: v6e
topology: v6e:2x2x1
jax: 0.10.0
libtpu: 0.0.40
codegen_flags: <defaults>
</compile_context>

<pallas_src>
import functools

import jax
import jax.numpy as jnp
from jax import lax
from jax.experimental import pallas as pl
from jax.experimental.pallas import tpu as pltpu


# --- network hyperparameters (synthetic "native tcnn module") ----------------
N_INPUT_DIMS = 4
N_HIDDEN = 64
N_OUTPUT_DIMS = 16
BATCH_GRANULARITY = 128          # _C.batch_size_granularity()
PARAM_DTYPE = jnp.float32        # Precision.Fp32 -> loss_scale = 1.0
LOSS_SCALE = 1.0
SEED = 1337

# --- kernel layout / tiling parameters ----------------------------------------
PACK = 8                                  # batch rows packed per lane-dense row
PACKED_IN = PACK * N_INPUT_DIMS           # 32
PACKED_HID = PACK * N_HIDDEN              # 512
PACKED_OUT = PACK * N_OUTPUT_DIMS         # 128  (one full vreg lane row)
TILE_BATCH_MAX = 8192                     # batch rows per grid step (sweepable)
VMEM_LIMIT_BYTES = 16 * 1024 * 1024       # actual footprint ~2 MiB; headroom only

assert PACKED_OUT == 128                  # packed output width == one vreg row


def _device_config():
    """Best-effort MXU tile width + TensorCore count for the current chip."""
    try:
        kind = jax.devices()[0].device_kind.lower()
    except Exception:
        kind = ""
    mxu = 128 if any(v in kind for v in ("v2", "v3", "v4", "v5")) else 256
    num_cores = 2 if "v7" in kind else 1   # v7x: 2 TCs/chip share the grid
    return mxu, num_cores


MXU_WIDTH, NUM_CORES = _device_config()
# Hidden-layer lane-group width = one MXU tile, so every group is a single
# vmatmul against the small shared block-diag w1 (no all-zero weight tiles).
GROUP_WIDTH = min(PACKED_HID, MXU_WIDTH)          # 128 (v5e) / 256 (v6e/v7x)
NUM_GROUPS = PACKED_HID // GROUP_WIDTH            # 4 / 2
W1_COPIES = GROUP_WIDTH // N_HIDDEN               # 2 / 4


def _round_up(x, m):
    return (x + m - 1) // m * m


def _block_diag(w, copies):
    """`copies`-way block-diagonal expansion of a weight matrix (zeros elsewhere)."""
    d_in, d_out = w.shape
    eye = jnp.eye(copies, dtype=w.dtype)
    big = eye[:, None, :, None] * w[None, :, None, :]
    return big.reshape(copies * d_in, copies * d_out)


def _pick_tile_rows(rows):
    """rows = padded_batch // PACK (always a multiple of 16).

    Single-TC chips (v5e/v6e): the grid is a serial loop -> take the largest
    tile that fits (amortize ~0.35us/step grid overhead).
    v7x (2 TCs): produce an even number (>=4 when possible) of near-equal
    grid steps so the 'parallel' batch axis shards evenly across both cores.
    """
    max_tile = TILE_BATCH_MAX // PACK        # 1024 packed rows = 8192 batch rows
    min_tile = BATCH_GRANULARITY // PACK     # 16 packed rows   = 128 batch rows
    if NUM_CORES <= 1:
        return min(rows, max_tile)
    if rows <= 2 * min_tile:
        return rows
    steps = -(-rows // max_tile)
    if steps < 4 and rows >= 4 * min_tile:
        steps = 4
    if steps % 2:
        steps += 1
    tile = _round_up(-(-rows // steps), min_tile)
    return min(tile, max_tile)


def _pick_chunk_rows(tile_rows):
    """In-kernel sub-block size (packed rows).  Keeps bf16 intermediates
    register-resident between layers instead of spilling [tile,512] activations."""
    for c in (64, 48, 32, 16):
        if tile_rows % c == 0:
            return c
    return tile_rows


def _fused_mlp_kernel(x_ref, w0_ref, w1g_ref, w2_ref, o_ref, *,
                      chunk_rows, num_chunks):
    # x_ref  : (tile_rows, 32)   packed activations (f32)
    # w0_ref : (32, 512)  bf16 block_diag(w0, 8)        -- VMEM resident
    # w1g_ref: (GW, GW)   bf16 block_diag(w1, GW/64)    -- shared by all lane groups
    # w2_ref : (512, 128) bf16 block_diag(w2, 8)
    # o_ref  : (tile_rows, 128)  lane-dense f32 output
    w0 = w0_ref[...]
    w1g = w1g_ref[...]
    w2 = w2_ref[...]

    def body(c, carry):
        r = pl.multiple_of(c * chunk_rows, chunk_rows)
        x = x_ref[pl.ds(r, chunk_rows), :].astype(jnp.bfloat16)
        h = jnp.dot(x, w0, preferred_element_type=jnp.float32)
        h = jnp.maximum(h, 0.0).astype(jnp.bfloat16)
        # Hidden layer: exploit block-diagonal structure.  Each MXU-tile-wide
        # lane group of h multiplies the same small block-diag weight, skipping
        # the all-zero off-diagonal tiles of the dense 512x512 matmul.
        parts = []
        for g in range(NUM_GROUPS):                       # static, lane-aligned slices
            hg = h[:, g * GROUP_WIDTH:(g + 1) * GROUP_WIDTH]
            pg = jnp.dot(hg, w1g, preferred_element_type=jnp.float32)
            parts.append(jnp.maximum(pg, 0.0).astype(jnp.bfloat16))
        h2 = parts[0] if NUM_GROUPS == 1 else jnp.concatenate(parts, axis=-1)
        out = jnp.dot(h2, w2, preferred_element_type=jnp.float32)
        o_ref[pl.ds(r, chunk_rows), :] = out.astype(o_ref.dtype)
        return carry

    if num_chunks == 1:
        body(0, 0)
    else:
        lax.fori_loop(0, num_chunks, body, 0, unroll=num_chunks <= 8)


def _fused_mlp(x_packed, w0b, w1g, w2b, tile_rows, chunk_rows):
    rows = x_packed.shape[0]
    num_chunks = tile_rows // chunk_rows
    kernel = functools.partial(_fused_mlp_kernel,
                               chunk_rows=chunk_rows, num_chunks=num_chunks)
    return pl.pallas_call(
        kernel,
        out_shape=jax.ShapeDtypeStruct((rows, PACKED_OUT), jnp.float32),
        grid_spec=pltpu.PrefetchScalarGridSpec(
            num_scalar_prefetch=0,
            grid=(pl.cdiv(rows, tile_rows),),
            in_specs=[
                pl.BlockSpec((tile_rows, PACKED_IN), lambda i: (i, 0)),
                # Weights: constant index_map -> fetched once, stay VMEM resident.
                pl.BlockSpec(w0b.shape, lambda i: (0, 0)),
                pl.BlockSpec(w1g.shape, lambda i: (0, 0)),
                pl.BlockSpec(w2b.shape, lambda i: (0, 0)),
            ],
            out_specs=pl.BlockSpec((tile_rows, PACKED_OUT), lambda i: (i, 0)),
        ),
        compiler_params=pltpu.CompilerParams(
            dimension_semantics=("parallel",),   # batch axis -> megacore sharding
            vmem_limit_bytes=VMEM_LIMIT_BYTES,
        ),
    )(x_packed, w0b, w1g, w2b)


def _forward_impl(x, w0b, w1g, w2b):
    """Mirrors torch Module.forward: pad to batch granularity, run the fused
    network in compute precision, slice back to [:batch, :n_output_dims]."""
    batch = x.shape[0]
    padded = _round_up(batch, BATCH_GRANULARITY)
    if padded != batch:
        # TODO(synk): mask the ragged tail in-kernel instead of padding; under
        # jit the pad fuses with the packing reshape into a single pass.
        x = jnp.pad(x, ((0, padded - batch), (0, 0)))
    x = x.astype(jnp.float32)
    # Free row-major reshape: pack PACK consecutive batch rows per lane-dense row.
    rows = padded // PACK
    x_packed = x.reshape(rows, PACKED_IN)
    tile_rows = _pick_tile_rows(rows)
    chunk_rows = _pick_chunk_rows(tile_rows)
    out_packed = _fused_mlp(x_packed, w0b, w1g, w2b, tile_rows, chunk_rows)
    # NOTE: keep f32 output (module advertises Fp32); switch out_shape/store to
    # bf16 if downstream consumers accept it (halves dominant HBM write stream).
    out = out_packed.reshape(padded, N_OUTPUT_DIMS)      # free reshape
    return out[:batch, :N_OUTPUT_DIMS]


_forward_jit = jax.jit(_forward_impl)


class Module:
    """JAX analogue of the tinycudann torch Module (forward only)."""

    def __init__(self, seed=SEED):
        self.seed = seed
        self.n_input_dims = N_INPUT_DIMS
        self.n_output_dims = N_OUTPUT_DIMS
        self.dtype = PARAM_DTYPE
        self.loss_scale = LOSS_SCALE
        # Deterministic "initial_params(seed)" — flat parameter vector, like tcnn.
        n_params = (N_INPUT_DIMS * N_HIDDEN
                    + N_HIDDEN * N_HIDDEN
                    + N_HIDDEN * N_OUTPUT_DIMS)
        key = jax.random.PRNGKey(seed)
        self.params = (jax.random.normal(key, (n_params,), dtype=jnp.float32)
                       * 0.1).astype(PARAM_DTYPE)
        self._cache_kernel_weights()

    def _unpack_params(self):
        p = self.params.astype(PARAM_DTYPE)
        o0 = N_INPUT_DIMS * N_HIDDEN
        o1 = o0 + N_HIDDEN * N_HIDDEN
        w0 = p[:o0].reshape(N_INPUT_DIMS, N_HIDDEN)
        w1 = p[o0:o1].reshape(N_HIDDEN, N_HIDDEN)
        w2 = p[o1:].reshape(N_HIDDEN, N_OUTPUT_DIMS)
        return w0, w1, w2

    def _cache_kernel_weights(self):
        # Precomputed once per params: bf16 block-diagonal weights for the
        # lane-packed layout (MXU-native operands; f32 accumulation in-kernel).
        # TODO(synk): use higher-precision matmul (precision=HIGHEST / 3-pass
        # bf16) if exact fp32 parity with tcnn Precision.Fp32 is required.
        w0, w1, w2 = self._unpack_params()
        self._w0b = _block_diag(w0.astype(jnp.bfloat16), PACK)        # (32, 512)
        self._w1g = _block_diag(w1.astype(jnp.bfloat16), W1_COPIES)   # (GW, GW)
        self._w2b = _block_diag(w2.astype(jnp.bfloat16), PACK)        # (512, 128)

    def forward(self, x):
        # x: [batch, n_input_dims]
        # TODO(synk): autograd / loss-scaling machinery (_module_function
        # backward, bwd_bwd_input) is not reproduced; forward-only semantics.
        return _forward_jit(x, self._w0b, self._w1g, self._w2b)

    def __call__(self, x):
        return self.forward(x)


def _reference_bf16(x, w0, w1, w2):
    # Mirrors the kernel arithmetic: bf16 operands, f32 accumulation.
    def bf(a):
        return a.astype(jnp.bfloat16)
    h = jnp.maximum(jnp.dot(bf(x), bf(w0), preferred_element_type=jnp.float32), 0.0)
    h = jnp.maximum(jnp.dot(bf(h), bf(w1), preferred_element_type=jnp.float32), 0.0)
    return jnp.dot(bf(h), bf(w2), preferred_element_type=jnp.float32)


if __name__ == "__main__":
    module = Module(seed=SEED)
    w0, w1, w2 = module._unpack_params()

    # Small deterministic input consistent with the module (batch=8, 4 input dims).
    x = jax.random.normal(jax.random.PRNGKey(0), (8, N_INPUT_DIMS), dtype=jnp.float32)
    out = jax.block_until_ready(module(x))
    assert out.shape == (8, N_OUTPUT_DIMS), out.shape

    ref = _reference_bf16(x, w0, w1, w2)
    assert jnp.allclose(out, ref, atol=1e-4, rtol=1e-3), \
        float(jnp.max(jnp.abs(out - ref)))
    # Sanity check against pure-f32 math (bf16 MXU operands => loose tolerance).
    ref32 = jnp.maximum(jnp.maximum(x @ w0, 0.0) @ w1, 0.0) @ w2
    assert jnp.allclose(out, ref32, atol=5e-3, rtol=5e-2)

    # Exercise the batch-granularity padding / slicing path (non-multiple of 128).
    x2 = jax.random.normal(jax.random.PRNGKey(1), (200, N_INPUT_DIMS),
                           dtype=jnp.float32)
    out2 = jax.block_until_ready(module(x2))
    assert out2.shape == (200, N_OUTPUT_DIMS), out2.shape
    assert jnp.allclose(out2, _reference_bf16(x2, w0, w1, w2), atol=1e-4, rtol=1e-3)

    # Exercise the multi-chunk / multi-tile path (in-kernel fori_loop, v7x split).
    x3 = jax.random.normal(jax.random.PRNGKey(2), (2200, N_INPUT_DIMS),
                           dtype=jnp.float32)
    out3 = jax.block_until_ready(module(x3))
    assert out3.shape == (2200, N_OUTPUT_DIMS), out3.shape
    assert jnp.allclose(out3, _reference_bf16(x3, w0, w1, w2), atol=1e-4, rtol=1e-3)

    print("KERNEL_OK")
</pallas_src>

<mosaic_0001>
module attributes {stable_mosaic.version = 11 : i64} {
  func.func @_fused_mlp_kernel(%arg0: i32, %arg1: memref<16x32xf32, #tpu.memory_space<vmem>>, %arg2: memref<32x512xbf16, #tpu.memory_space<vmem>>, %arg3: memref<256x256xbf16, #tpu.memory_space<vmem>>, %arg4: memref<512x128xbf16, #tpu.memory_space<vmem>>, %arg5: memref<16x128xf32, #tpu.memory_space<vmem>>) attributes {dimension_semantics = [#tpu.dimension_semantics<parallel>], iteration_bounds = array<i64: 1>, scalar_prefetch = 0 : i64, scratch_operands = 0 : i64, tpu.core_type = #tpu.core_type<tc>, window_params = [{transform_indices = @transform_0, window_bounds = array<i64: 16, 32>}, {pipeline_mode = #tpu.pipeline_mode<synchronous>, transform_indices = @transform_1, window_bounds = array<i64: 32, 512>}, {pipeline_mode = #tpu.pipeline_mode<synchronous>, transform_indices = @transform_2, window_bounds = array<i64: 256, 256>}, {pipeline_mode = #tpu.pipeline_mode<synchronous>, transform_indices = @transform_3, window_bounds = array<i64: 512, 128>}, {transform_indices = @transform_4, window_bounds = array<i64: 16, 128>}]} {
    %c0 = arith.constant 0 : index
    %c0_0 = arith.constant 0 : index
    %0 = vector.load %arg2[%c0, %c0_0] : memref<32x512xbf16, #tpu.memory_space<vmem>>, vector<32x512xbf16>
    %c0_1 = arith.constant 0 : index
    %c0_2 = arith.constant 0 : index
    %1 = vector.load %arg3[%c0_1, %c0_2] : memref<256x256xbf16, #tpu.memory_space<vmem>>, vector<256x256xbf16>
    %c0_3 = arith.constant 0 : index
    %c0_4 = arith.constant 0 : index
    %2 = vector.load %arg4[%c0_3, %c0_4] : memref<512x128xbf16, #tpu.memory_space<vmem>>, vector<512x128xbf16>
    %c0_i32 = arith.constant 0 : i32
    %3 = tpu.assume_multiple %c0_i32, 16 : i32
    %4 = arith.index_cast %3 : i32 to index
    %c0_5 = arith.constant 0 : index
    %5 = vector.load %arg1[%4, %c0_5] : memref<16x32xf32, #tpu.memory_space<vmem>>, vector<16x32xf32>
    %6 = arith.truncf %5 : vector<16x32xf32> to vector<16x32xbf16>
    %cst = arith.constant dense<0.000000e+00> : vector<16x512xf32>
    %7 = tpu.matmul %6, %0, %cst {dimension_numbers = #tpu.dot_dimension_numbers<[1], [0], [0], [1], [0, 0, 1, 1], [], []>} : vector<16x32xbf16>, vector<32x512xbf16>, vector<16x512xf32> -> vector<16x512xf32>
    %cst_6 = arith.constant 0.000000e+00 : f32
    %8 = vector.broadcast %cst_6 : f32 to vector<16x512xf32>
    %9 = arith.maximumf %7, %8 : vector<16x512xf32>
    %10 = arith.truncf %9 : vector<16x512xf32> to vector<16x512xbf16>
    %11 = vector.extract_strided_slice %10 {offsets = [0, 0], sizes = [16, 256], strides = [1, 1]} : vector<16x512xbf16> to vector<16x256xbf16>
    %cst_7 = arith.constant dense<0.000000e+00> : vector<16x256xf32>
    %12 = tpu.matmul %11, %1, %cst_7 {dimension_numbers = #tpu.dot_dimension_numbers<[1], [0], [0], [1], [0, 0, 1, 1], [], []>} : vector<16x256xbf16>, vector<256x256xbf16>, vector<16x256xf32> -> vector<16x256xf32>
    %cst_8 = arith.constant 0.000000e+00 : f32
    %13 = vector.broadcast %cst_8 : f32 to vector<16x256xf32>
    %14 = arith.maximumf %12, %13 : vector<16x256xf32>
    %15 = arith.truncf %14 : vector<16x256xf32> to vector<16x256xbf16>
    %16 = vector.extract_strided_slice %10 {offsets = [0, 256], sizes = [16, 256], strides = [1, 1]} : vector<16x512xbf16> to vector<16x256xbf16>
    %cst_9 = arith.constant dense<0.000000e+00> : vector<16x256xf32>
    %17 = tpu.matmul %16, %1, %cst_9 {dimension_numbers = #tpu.dot_dimension_numbers<[1], [0], [0], [1], [0, 0, 1, 1], [], []>} : vector<16x256xbf16>, vector<256x256xbf16>, vector<16x256xf32> -> vector<16x256xf32>
    %cst_10 = arith.constant 0.000000e+00 : f32
    %18 = vector.broadcast %cst_10 : f32 to vector<16x256xf32>
    %19 = arith.maximumf %17, %18 : vector<16x256xf32>
    %20 = arith.truncf %19 : vector<16x256xf32> to vector<16x256xbf16>
    %21 = tpu.concatenate %15, %20 in 1 : vector<16x256xbf16>, vector<16x256xbf16> -> vector<16x512xbf16>
    %cst_11 = arith.constant dense<0.000000e+00> : vector<16x128xf32>
    %22 = tpu.matmul %21, %2, %cst_11 {dimension_numbers = #tpu.dot_dimension_numbers<[1], [0], [0], [1], [0, 0, 1, 1], [], []>} : vector<16x512xbf16>, vector<512x128xbf16>, vector<16x128xf32> -> vector<16x128xf32>
    %23 = arith.index_cast %3 : i32 to index
    %c0_12 = arith.constant 0 : index
    %24 = vector.load %arg5[%23, %c0_12] : memref<16x128xf32, #tpu.memory_space<vmem>>, vector<16x128xf32>
    tpu.vector_store %arg5[%23, %c0_12], %22 {strides = array<i32>} : memref<16x128xf32, #tpu.memory_space<vmem>>, vector<16x128xf32>,
    return
  }
  func.func @transform_0(%arg0: i32) -> (i32, i32) {
    %c0_i32 = arith.constant 0 : i32
    %c0_i32_0 = arith.constant 0 : i32
    return %arg0, %c0_i32 : i32, i32
  }
  func.func @transform_1(%arg0: i32) -> (i32, i32) {
    %c0_i32 = arith.constant 0 : i32
    %c0_i32_0 = arith.constant 0 : i32
    %c0_i32_1 = arith.constant 0 : i32
    return %c0_i32, %c0_i32_0 : i32, i32
  }
  func.func @transform_2(%arg0: i32) -> (i32, i32) {
    %c0_i32 = arith.constant 0 : i32
    %c0_i32_0 = arith.constant 0 : i32
    %c0_i32_1 = arith.constant 0 : i32
    return %c0_i32, %c0_i32_0 : i32, i32
  }
  func.func @transform_3(%arg0: i32) -> (i32, i32) {
    %c0_i32 = arith.constant 0 : i32
    %c0_i32_0 = arith.constant 0 : i32
    %c0_i32_1 = arith.constant 0 : i32
    return %c0_i32, %c0_i32_0 : i32, i32
  }
  func.func @transform_4(%arg0: i32) -> (i32, i32) {
    %c0_i32 = arith.constant 0 : i32
    %c0_i32_0 = arith.constant 0 : i32
    return %arg0, %c0_i32 : i32, i32
  }
}

</mosaic_0001>

<llo_original>
// kernel: _forward_impl.1
$region0: #{_forward_impl.1}
  #allocation0 [shape = 'u32[]', space=smem, size = 0x4, offset = 0x4, fixed_abs, tag = 'smem constant byte address 0x4 - core index']
  #allocation1 [shape = 'u32[144,128]{1,0:T(1,128)}', space=vmem, size = 0x12000, scoped, tag = 'internal scratch']
  %s0 = inlined_call_operand.vmem [shape: f32[16,32], index: 0, kind: input, shape index: {}]
  %s1 = inlined_call_operand.hbm [shape: bf16[32,512], index: 1, kind: input, shape index: {}]
  %s2 = inlined_call_operand.vmem [shape: bf16[256,256], index: 2, kind: input, shape index: {}]
  %s3 = inlined_call_operand.hbm [shape: bf16[512,128], index: 3, kind: input, shape index: {}]
  %s4 = inlined_call_operand.vmem [shape: f32[16,128], index: 4, kind: output, shape index: {}]
  %s5 = sld [smem:[#allocation0]]
  $region34: #{_forward_impl.1} parent=0
    _
  %s7 = ssub.s32 1, %s5
  %s8 = scalar_select 0, %s7, %s5
  $region1: #{_forward_impl.1} parent=0
    #allocation2 [shape = 'u8[32768]{0}', space=vmem, size = 0x8000, scoped, tag = 'input window, operand 1, single buffered']
    #allocation3 [shape = 's32[1]{0}', space=sflag, size = 0x4, scoped, tag = 'scoped memory for _forward_impl.1']
    #allocation4 [shape = 'u8[131072]{0}', space=vmem, size = 0x20000, scoped, tag = 'input window, operand 3, single buffered']
    #allocation5 [shape = 's32[1]{0}', space=sflag, size = 0x4, scoped, tag = 'scoped memory for _forward_impl.1']
    %9 = vsyncpa [#allocation3], 0
    %10 = vsyncpa [#allocation5], 0
    // Predicated region
    $region2: #{_forward_impl.1} parent=1 // pred_check
      _
    $region3: #{_forward_impl.1} parent=1 // pred_check_branch
      %12 = sbr.rel (0) target = $region5
    $region4: #{_forward_impl.1} parent=1 // pred_region
      _
    $region5: #{_forward_impl.1} parent=1 // pred_fallthru
      _
    // Predicated region
    $region6: #{_forward_impl.1} parent=1 // pred_check
      _
    $region7: #{_forward_impl.1} parent=1 // pred_check_branch
      %14 = sbr.rel (0) target = $region9
    $region8: #{_forward_impl.1} parent=1 // pred_region
      %s16 = ssub.s32 1024, 1024
      %17 = vsyncadd [#allocation3], %s16
      %s18 = sshll.u32 [#allocation2], 4
      %s19 = int_to_ptr.vmem [resolvable:$true] %s18
      %24 = dma.hbm_to_vmem [thread:$0]  %s1, 1024, %s19, [#allocation3], 256, 256, 16
    $region9: #{_forward_impl.1} parent=1 // pred_fallthru
      _
    // Predicated region
    $region10: #{_forward_impl.1} parent=1 // pred_check
      _
    $region11: #{_forward_impl.1} parent=1 // pred_check_branch
      %26 = sbr.rel (0) target = $region13
    $region12: #{_forward_impl.1} parent=1 // pred_region
      _
    $region13: #{_forward_impl.1} parent=1 // pred_fallthru
      _
    // Predicated region
    $region14: #{_forward_impl.1} parent=1 // pred_check
      _
    $region15: #{_forward_impl.1} parent=1 // pred_check_branch
      %28 = sbr.rel (0) target = $region17
    $region16: #{_forward_impl.1} parent=1 // pred_region
      %s30 = ssub.s32 4096, 4096
      %31 = vsyncadd [#allocation5], %s30
      %s32 = sshll.u32 [#allocation4], 4
      %s33 = int_to_ptr.vmem [resolvable:$true] %s32
      %38 = dma.hbm_to_vmem [thread:$0]  %s3, 4096, %s33, [#allocation5], 64, 64, 4
    $region17: #{_forward_impl.1} parent=1 // pred_fallthru
      _
    // Predicated region
    $region18: #{_forward_impl.1} parent=1 // pred_check
      _
    $region19: #{_forward_impl.1} parent=1 // pred_check_branch
      %40 = sbr.rel (0) target = $region21
    $region20: #{_forward_impl.1} parent=1 // pred_region
      %41 = dma.done [#allocation3], 1024
    $region21: #{_forward_impl.1} parent=1 // pred_fallthru
      _
    // Predicated region
    $region22: #{_forward_impl.1} parent=1 // pred_check
      _
    $region23: #{_forward_impl.1} parent=1 // pred_check_branch
      %43 = sbr.rel (0) target = $region25
    $region24: #{_forward_impl.1} parent=1 // pred_region
      %44 = dma.done [#allocation5], 4096
    $region25: #{_forward_impl.1} parent=1 // pred_fallthru
      _
    %v46 = vld [vmem:[#allocation2] sm:$0xff]
    %v47 = vld [vmem:[#allocation2 + $0x8] sm:$0xff]
    %v48 = vld [vmem:[#allocation2 + $0x10] sm:$0xff]
    %v49 = vld [vmem:[#allocation2 + $0x18] sm:$0xff]
    %v50 = vld [vmem:[#allocation2 + $0x20] sm:$0xff]
    %v51 = vld [vmem:[#allocation2 + $0x28] sm:$0xff]
    %v52 = vld [vmem:[#allocation2 + $0x30] sm:$0xff]
    %v53 = vld [vmem:[#allocation2 + $0x38] sm:$0xff]
    %v54 = vld [vmem:[%s2] sm:$0xff]
    %v55 = vld [vmem:[%s2 + $0x8] sm:$0xff]
    %v56 = vld [vmem:[%s2 + $0x10] sm:$0xff]
    %v57 = vld [vmem:[%s2 + $0x18] sm:$0xff]
    %v58 = vld [vmem:[%s2 + $0x20] sm:$0xff]
    %v59 = vld [vmem:[%s2 + $0x28] sm:$0xff]
    %v60 = vld [vmem:[%s2 + $0x30] sm:$0xff]
    %v61 = vld [vmem:[%s2 + $0x38] sm:$0xff]
    %v62 = vld [vmem:[%s2 + $0x40] sm:$0xff]
    %v63 = vld [vmem:[%s2 + $0x48] sm:$0xff]
    %v64 = vld [vmem:[%s2 + $0x50] sm:$0xff]
    %v65 = vld [vmem:[%s2 + $0x58] sm:$0xff]
    %v66 = vld [vmem:[%s2 + $0x60] sm:$0xff]
    %v67 = vld [vmem:[%s2 + $0x68] sm:$0xff]
    %v68 = vld [vmem:[%s2 + $0x70] sm:$0xff]
    %v69 = vld [vmem:[%s2 + $0x78] sm:$0xff]
    %v70 = vld [vmem:[%s2 + $0x80] sm:$0xff]
    %v71 = vld [vmem:[%s2 + $0x88] sm:$0xff]
    %v72 = vld [vmem:[%s2 + $0x90] sm:$0xff]
    %v73 = vld [vmem:[%s2 + $0x98] sm:$0xff]
    %v74 = vld [vmem:[%s2 + $0xa0] sm:$0xff]
    %v75 = vld [vmem:[%s2 + $0xa8] sm:$0xff]
    %v76 = vld [vmem:[%s2 + $0xb0] sm:$0xff]
    %v77 = vld [vmem:[%s2 + $0xb8] sm:$0xff]
    %v78 = vld [vmem:[%s2 + $0xc0] sm:$0xff]
    %v79 = vld [vmem:[%s2 + $0xc8] sm:$0xff]
    %v80 = vld [vmem:[%s2 + $0xd0] sm:$0xff]
    %v81 = vld [vmem:[%s2 + $0xd8] sm:$0xff]
    %v82 = vld [vmem:[%s2 + $0xe0] sm:$0xff]
    %v83 = vld [vmem:[%s2 + $0xe8] sm:$0xff]
    %v84 = vld [vmem:[%s2 + $0xf0] sm:$0xff]
    %v85 = vld [vmem:[%s2 + $0xf8] sm:$0xff]
    %v86 = vld [vmem:[#allocation4] sm:$0xf]
    %v87 = vld [vmem:[#allocation4 + $0x4] sm:$0xf]
    %v88 = vld [vmem:[#allocation4 + $0x8] sm:$0xf]
    %v89 = vld [vmem:[#allocation4 + $0xc] sm:$0xf]
    %v90 = vld [vmem:[#allocation4 + $0x10] sm:$0xf]
    %v91 = vld [vmem:[#allocation4 + $0x14] sm:$0xf]
    %v92 = vld [vmem:[#allocation4 + $0x18] sm:$0xf]
    %v93 = vld [vmem:[#allocation4 + $0x1c] sm:$0xf]
    %v94 = vld [vmem:[#allocation4 + $0x20] sm:$0xf]
    %v95 = vld [vmem:[#allocation4 + $0x24] sm:$0xf]
    %v96 = vld [vmem:[#allocation4 + $0x28] sm:$0xf]
    %v97 = vld [vmem:[#allocation4 + $0x2c] sm:$0xf]
    %v98 = vld [vmem:[#allocation4 + $0x30] sm:$0xf]
    %v99 = vld [vmem:[#allocation4 + $0x34] sm:$0xf]
    %v100 = vld [vmem:[#allocation4 + $0x38] sm:$0xf]
    %v101 = vld [vmem:[#allocation4 + $0x3c] sm:$0xf]
    %v102 = vld [vmem:[#allocation4 + $0x40] sm:$0xf]
    %v103 = vld [vmem:[#allocation4 + $0x44] sm:$0xf]
    %v104 = vld [vmem:[#allocation4 + $0x48] sm:$0xf]
    %v105 = vld [vmem:[#allocation4 + $0x4c] sm:$0xf]
    %v106 = vld [vmem:[#allocation4 + $0x50] sm:$0xf]
    %v107 = vld [vmem:[#allocation4 + $0x54] sm:$0xf]
    %v108 = vld [vmem:[#allocation4 + $0x58] sm:$0xf]
    %v109 = vld [vmem:[#allocation4 + $0x5c] sm:$0xf]
    %v110 = vld [vmem:[#allocation4 + $0x60] sm:$0xf]
    %v111 = vld [vmem:[#allocation4 + $0x64] sm:$0xf]
    %v112 = vld [vmem:[#allocation4 + $0x68] sm:$0xf]
    %v113 = vld [vmem:[#allocation4 + $0x6c] sm:$0xf]
    %v114 = vld [vmem:[#allocation4 + $0x70] sm:$0xf]
    %v115 = vld [vmem:[#allocation4 + $0x74] sm:$0xf]
    %v116 = vld [vmem:[#allocation4 + $0x78] sm:$0xf]
    %v117 = vld [vmem:[#allocation4 + $0x7c] sm:$0xf]
    %v118 = vld [vmem:[#allocation4 + $0x80] sm:$0xf]
    %v119 = vld [vmem:[#allocation4 + $0x84] sm:$0xf]
    %v120 = vld [vmem:[#allocation4 + $0x88] sm:$0xf]
    %v121 = vld [vmem:[#allocation4 + $0x8c] sm:$0xf]
    %v122 = vld [vmem:[#allocation4 + $0x90] sm:$0xf]
    %v123 = vld [vmem:[#allocation4 + $0x94] sm:$0xf]
    %v124 = vld [vmem:[#allocation4 + $0x98] sm:$0xf]
    %v125 = vld [vmem:[#allocation4 + $0x9c] sm:$0xf]
    %v126 = vld [vmem:[#allocation4 + $0xa0] sm:$0xf]
    %v127 = vld [vmem:[#allocation4 + $0xa4] sm:$0xf]
    %v128 = vld [vmem:[#allocation4 + $0xa8] sm:$0xf]
    %v129 = vld [vmem:[#allocation4 + $0xac] sm:$0xf]
    %v130 = vld [vmem:[#allocation4 + $0xb0] sm:$0xf]
    %v131 = vld [vmem:[#allocation4 + $0xb4] sm:$0xf]
    %v132 = vld [vmem:[#allocation4 + $0xb8] sm:$0xf]
    %v133 = vld [vmem:[#allocation4 + $0xbc] sm:$0xf]
    %v134 = vld [vmem:[#allocation4 + $0xc0] sm:$0xf]
    %v135 = vld [vmem:[#allocation4 + $0xc4] sm:$0xf]
    %v136 = vld [vmem:[#allocation4 + $0xc8] sm:$0xf]
    %v137 = vld [vmem:[#allocation4 + $0xcc] sm:$0xf]
    %v138 = vld [vmem:[#allocation4 + $0xd0] sm:$0xf]
    %v139 = vld [vmem:[#allocation4 + $0xd4] sm:$0xf]
    %v140 = vld [vmem:[#allocation4 + $0xd8] sm:$0xf]
    %v141 = vld [vmem:[#allocation4 + $0xdc] sm:$0xf]
    %v142 = vld [vmem:[#allocation4 + $0xe0] sm:$0xf]
    %v143 = vld [vmem:[#allocation4 + $0xe4] sm:$0xf]
    %v144 = vld [vmem:[#allocation4 + $0xe8] sm:$0xf]
    %v145 = vld [vmem:[#allocation4 + $0xec] sm:$0xf]
    %v146 = vld [vmem:[#allocation4 + $0xf0] sm:$0xf]
    %v147 = vld [vmem:[#allocation4 + $0xf4] sm:$0xf]
    %v148 = vld [vmem:[#allocation4 + $0xf8] sm:$0xf]
    %v149 = vld [vmem:[#allocation4 + $0xfc] sm:$0xf]
    %v150 = vld [vmem:[%s0] sm:$0xff]
    %v151 = vld [vmem:[%s0 + $0x8] sm:$0xff]
    %v152 = vpack.c.bf16 %v151, %v150
    %v161 = vunpack.c.l.b16 %v46
    %v162 = vunpack.c.h.b16 %v46
    %v163 = vunpack.c.l.b16 %v47
    %v164 = vunpack.c.h.b16 %v47
    %v165 = vunpack.c.l.b16 %v48
    %v166 = vunpack.c.h.b16 %v48
    %v167 = vunpack.c.l.b16 %v49
    %v168 = vunpack.c.h.b16 %v49
    %v169 = vunpack.c.l.b16 %v50
    %v170 = vunpack.c.h.b16 %v50
    %v171 = vunpack.c.l.b16 %v51
    %v172 = vunpack.c.h.b16 %v51
    %v173 = vunpack.c.l.b16 %v52
    %v174 = vunpack.c.h.b16 %v52
    %v175 = vunpack.c.l.b16 %v53
    %v176 = vunpack.c.h.b16 %v53
    %v177 = vpack.c.b16 %v165, %v161
    %v178 = vpack.c.b16 %v166, %v162
    %v179 = vpack.c.b16 %v167, %v163
    %v180 = vpack.c.b16 %v168, %v164
    %v181 = vpack.c.b16 %v173, %v169
    %v182 = vpack.c.b16 %v174, %v170
    %v183 = vpack.c.b16 %v175, %v171
    %v184 = vpack.c.b16 %v176, %v172
    %vm193 = vcmask 261120
    %v195 = vsel %vm193, %v152, 0
    %197 = vmatprep.subr.bf16.mxu0 0
    %198 = vmatpush1.bf16.msra.mxu0 0
    %199 = vmatprep.subr.bf16.mxu0 0
    %200 = vmatpush1.bf16.msra.mxu0 0
    %201 = vmatprep.subr.bf16.mxu0 0
    %202 = vmatpush1.bf16.msra.mxu0 0
    %203 = vmatprep.subr.bf16.mxu0 0
    %204 = vmatpush1.bf16.msra.mxu0 0
    %205 = vmatprep.subr.bf16.mxu0 0
    %206 = vmatpush1.bf16.msra.mxu0 0
    %207 = vmatprep.subr.bf16.mxu0 0
    %208 = vmatpush1.bf16.msra.mxu0 0
    %209 = vmatprep.subr.bf16.mxu0 %v182
    %210 = vmatpush1.bf16.msra.mxu0 %v181
    %211 = vmatprep.subr.bf16.mxu0 %v178
    %212 = vmatpush1.bf16.msra.mxu0 %v177
    %213 = vmatprep.subr.bf16.mxu0 0
    %214 = vmatpush2.bf16.msra.mxu0 0
    %215 = vmatprep.subr.bf16.mxu0 0
    %216 = vmatpush2.bf16.msra.mxu0 0
    %217 = vmatprep.subr.bf16.mxu0 0
    %218 = vmatpush2.bf16.msra.mxu0 0
    %219 = vmatprep.subr.bf16.mxu0 0
    %220 = vmatpush2.bf16.msra.mxu0 0
    %221 = vmatprep.subr.bf16.mxu0 0
    %222 = vmatpush2.bf16.msra.mxu0 0
    %223 = vmatprep.subr.bf16.mxu0 0
    %224 = vmatpush2.bf16.msra.mxu0 0
    %225 = vmatprep.subr.bf16.mxu0 0
    %226 = vmatpush2.bf16.msra.mxu0 0
    %227 = vmatprep.subr.bf16.mxu0 0
    %228 = vmatpush2.bf16.msra.mxu0 0
    %229 = vmatprep.mubr.bf16.mxu0 0
    %230 = vmatmul.mubr.bf16.gmra.mxu0 %v195
    %v231 = vpop.f32.mrf.mxu0
    %v232 = vadd.f32 0.0, %v231
    %v233 = vpop.f32.mrf.mxu0
    %v234 = vadd.f32 0.0, %v233
    %v235 = vpop.f32.mrf.mxu0
    %v236 = vadd.f32 0.0, %v235
    %v237 = vpop.f32.mrf.mxu0
    %v238 = vadd.f32 0.0, %v237
    %239 = vdwg.mxu0
    %240 = vmatprep.subr.bf16.mxu0 0
    %241 = vmatpush1.bf16.msra.mxu0 0
    %242 = vmatprep.subr.bf16.mxu0 0
    %243 = vmatpush1.bf16.msra.mxu0 0
    %244 = vmatprep.subr.bf16.mxu0 0
    %245 = vmatpush1.bf16.msra.mxu0 0
    %246 = vmatprep.subr.bf16.mxu0 0
    %247 = vmatpush1.bf16.msra.mxu0 0
    %248 = vmatprep.subr.bf16.mxu0 0
    %249 = vmatpush1.bf16.msra.mxu0 0
    %250 = vmatprep.subr.bf16.mxu0 0
    %251 = vmatpush1.bf16.msra.mxu0 0
    %252 = vmatprep.subr.bf16.mxu0 %v184
    %253 = vmatpush1.bf16.msra.mxu0 %v183
    %254 = vmatprep.subr.bf16.mxu0 %v180
    %255 = vmatpush1.bf16.msra.mxu0 %v179
    %256 = vmatprep.subr.bf16.mxu0 0
    %257 = vmatpush2.bf16.msra.mxu0 0
    %258 = vmatprep.subr.bf16.mxu0 0
    %259 = vmatpush2.bf16.msra.mxu0 0
    %260 = vmatprep.subr.bf16.mxu0 0
    %261 = vmatpush2.bf16.msra.mxu0 0
    %262 = vmatprep.subr.bf16.mxu0 0
    %263 = vmatpush2.bf16.msra.mxu0 0
    %264 = vmatprep.subr.bf16.mxu0 0
    %265 = vmatpush2.bf16.msra.mxu0 0
    %266 = vmatprep.subr.bf16.mxu0 0
    %267 = vmatpush2.bf16.msra.mxu0 0
    %268 = vmatprep.subr.bf16.mxu0 0
    %269 = vmatpush2.bf16.msra.mxu0 0
    %270 = vmatprep.subr.bf16.mxu0 0
    %271 = vmatpush2.bf16.msra.mxu0 0
    %272 = vmatprep.mubr.bf16.mxu0 0
    %273 = vmatmul.mubr.bf16.gmra.mxu0 %v195
    %v274 = vpop.f32.mrf.mxu0
    %v275 = vadd.f32 0.0, %v274
    %v276 = vpop.f32.mrf.mxu0
    %v277 = vadd.f32 0.0, %v276
    %v278 = vpop.f32.mrf.mxu0
    %v279 = vadd.f32 0.0, %v278
    %v280 = vpop.f32.mrf.mxu0
    %v281 = vadd.f32 0.0, %v280
    %282 = vdwg.mxu0
    %v283 = vmax.f32 %v232, 0.0
    %v284 = vmax.f32 %v234, 0.0
    %v285 = vmax.f32 %v275, 0.0
    %v286 = vmax.f32 %v277, 0.0
    %v287 = vmax.f32 %v236, 0.0
    %v288 = vmax.f32 %v238, 0.0
    %v289 = vmax.f32 %v279, 0.0
    %v290 = vmax.f32 %v281, 0.0
    %v291 = vpack.c.bf16 %v287, %v283
    %v292 = vpack.c.bf16 %v288, %v284
    %v293 = vpack.c.bf16 %v289, %v285
    %v294 = vpack.c.bf16 %v290, %v286
    %v327 = vunpack.c.l.b16 %v54
    %v328 = vunpack.c.h.b16 %v54
    %v329 = vunpack.c.l.b16 %v55
    %v330 = vunpack.c.h.b16 %v55
    %v331 = vunpack.c.l.b16 %v56
    %v332 = vunpack.c.h.b16 %v56
    %v333 = vunpack.c.l.b16 %v57
    %v334 = vunpack.c.h.b16 %v57
    %v335 = vunpack.c.l.b16 %v58
    %v336 = vunpack.c.h.b16 %v58
    %v337 = vunpack.c.l.b16 %v59
    %v338 = vunpack.c.h.b16 %v59
    %v339 = vunpack.c.l.b16 %v60
    %v340 = vunpack.c.h.b16 %v60
    %v341 = vunpack.c.l.b16 %v61
    %v342 = vunpack.c.h.b16 %v61
    %v343 = vunpack.c.l.b16 %v62
    %v344 = vunpack.c.h.b16 %v62
    %v345 = vunpack.c.l.b16 %v63
    %v346 = vunpack.c.h.b16 %v63
    %v347 = vunpack.c.l.b16 %v64
    %v348 = vunpack.c.h.b16 %v64
    %v349 = vunpack.c.l.b16 %v65
    %v350 = vunpack.c.h.b16 %v65
    %v351 = vunpack.c.l.b16 %v66
    %v352 = vunpack.c.h.b16 %v66
    %v353 = vunpack.c.l.b16 %v67
    %v354 = vunpack.c.h.b16 %v67
    %v355 = vunpack.c.l.b16 %v68
    %v356 = vunpack.c.h.b16 %v68
    %v357 = vunpack.c.l.b16 %v69
    %v358 = vunpack.c.h.b16 %v69
    %v359 = vunpack.c.l.b16 %v70
    %v360 = vunpack.c.h.b16 %v70
    %v361 = vunpack.c.l.b16 %v71
    %v362 = vunpack.c.h.b16 %v71
    %v363 = vunpack.c.l.b16 %v72
    %v364 = vunpack.c.h.b16 %v72
    %v365 = vunpack.c.l.b16 %v73
    %v366 = vunpack.c.h.b16 %v73
    %v367 = vunpack.c.l.b16 %v74
    %v368 = vunpack.c.h.b16 %v74
    %v369 = vunpack.c.l.b16 %v75
    %v370 = vunpack.c.h.b16 %v75
    %v371 = vunpack.c.l.b16 %v76
    %v372 = vunpack.c.h.b16 %v76
    %v373 = vunpack.c.l.b16 %v77
    %v374 = vunpack.c.h.b16 %v77
    %v375 = vunpack.c.l.b16 %v78
    %v376 = vunpack.c.h.b16 %v78
    %v377 = vunpack.c.l.b16 %v79
    %v378 = vunpack.c.h.b16 %v79
    %v379 = vunpack.c.l.b16 %v80
    %v380 = vunpack.c.h.b16 %v80
    %v381 = vunpack.c.l.b16 %v81
    %v382 = vunpack.c.h.b16 %v81
    %v383 = vunpack.c.l.b16 %v82
    %v384 = vunpack.c.h.b16 %v82
    %v385 = vunpack.c.l.b16 %v83
    %v386 = vunpack.c.h.b16 %v83
    %v387 = vunpack.c.l.b16 %v84
    %v388 = vunpack.c.h.b16 %v84
    %v389 = vunpack.c.l.b16 %v85
    %v390 = vunpack.c.h.b16 %v85
    %v391 = vpack.c.b16 %v329, %v327
    %v392 = vpack.c.b16 %v330, %v328
    %v393 = vpack.c.b16 %v333, %v331
    %v394 = vpack.c.b16 %v334, %v332
    %v395 = vpack.c.b16 %v337, %v335
    %v396 = vpack.c.b16 %v338, %v336
    %v397 = vpack.c.b16 %v341, %v339
    %v398 = vpack.c.b16 %v342, %v340
    %v399 = vpack.c.b16 %v345, %v343
    %v400 = vpack.c.b16 %v346, %v344
    %v401 = vpack.c.b16 %v349, %v347
    %v402 = vpack.c.b16 %v350, %v348
    %v403 = vpack.c.b16 %v353, %v351
    %v404 = vpack.c.b16 %v354, %v352
    %v405 = vpack.c.b16 %v357, %v355
    %v406 = vpack.c.b16 %v358, %v356
    %v407 = vpack.c.b16 %v361, %v359
    %v408 = vpack.c.b16 %v362, %v360
    %v409 = vpack.c.b16 %v365, %v363
    %v410 = vpack.c.b16 %v366, %v364
    %v411 = vpack.c.b16 %v369, %v367
    %v412 = vpack.c.b16 %v370, %v368
    %v413 = vpack.c.b16 %v373, %v371
    %v414 = vpack.c.b16 %v374, %v372
    %v415 = vpack.c.b16 %v377, %v375
    %v416 = vpack.c.b16 %v378, %v376
    %v417 = vpack.c.b16 %v381, %v379
    %v418 = vpack.c.b16 %v382, %v380
    %v419 = vpack.c.b16 %v385, %v383
    %v420 = vpack.c.b16 %v386, %v384
    %v421 = vpack.c.b16 %v389, %v387
    %v422 = vpack.c.b16 %v390, %v388
    %455 = vmatprep.subr.bf16.mxu0 %v406
    %456 = vmatpush1.bf16.msra.mxu0 %v405
    %457 = vmatprep.subr.bf16.mxu0 %v404
    %458 = vmatpush1.bf16.msra.mxu0 %v403
    %459 = vmatprep.subr.bf16.mxu0 %v402
    %460 = vmatpush1.bf16.msra.mxu0 %v401
    %461 = vmatprep.subr.bf16.mxu0 %v400
    %462 = vmatpush1.bf16.msra.mxu0 %v399
    %463 = vmatprep.subr.bf16.mxu0 %v398
    %464 = vmatpush1.bf16.msra.mxu0 %v397
    %465 = vmatprep.subr.bf16.mxu0 %v396
    %466 = vmatpush1.bf16.msra.mxu0 %v395
    %467 = vmatprep.subr.bf16.mxu0 %v394
    %468 = vmatpush1.bf16.msra.mxu0 %v393
    %469 = vmatprep.subr.bf16.mxu0 %v392
    %470 = vmatpush1.bf16.msra.mxu0 %v391
    %471 = vmatprep.subr.bf16.mxu0 %v422
    %472 = vmatpush2.bf16.msra.mxu0 %v421
    %473 = vmatprep.subr.bf16.mxu0 %v420
    %474 = vmatpush2.bf16.msra.mxu0 %v419
    %475 = vmatprep.subr.bf16.mxu0 %v418
    %476 = vmatpush2.bf16.msra.mxu0 %v417
    %477 = vmatprep.subr.bf16.mxu0 %v416
    %478 = vmatpush2.bf16.msra.mxu0 %v415
    %479 = vmatprep.subr.bf16.mxu0 %v414
    %480 = vmatpush2.bf16.msra.mxu0 %v413
    %481 = vmatprep.subr.bf16.mxu0 %v412
    %482 = vmatpush2.bf16.msra.mxu0 %v411
    %483 = vmatprep.subr.bf16.mxu0 %v410
    %484 = vmatpush2.bf16.msra.mxu0 %v409
    %485 = vmatprep.subr.bf16.mxu0 %v408
    %486 = vmatpush2.bf16.msra.mxu0 %v407
    %487 = vmatprep.mubr.bf16.mxu0 %v292
    %488 = vmatmul.mubr.bf16.gmra.mxu0 %v291
    %v489 = vpop.f32.mrf.mxu0
    %v490 = vadd.f32 0.0, %v489
    %v491 = vpop.f32.mrf.mxu0
    %v492 = vadd.f32 0.0, %v491
    %v493 = vpop.f32.mrf.mxu0
    %v494 = vadd.f32 0.0, %v493
    %v495 = vpop.f32.mrf.mxu0
    %v496 = vadd.f32 0.0, %v495
    %497 = vdwg.mxu0
    %v498 = vmax.f32 %v490, 0.0
    %v499 = vmax.f32 %v492, 0.0
    %v500 = vmax.f32 %v494, 0.0
    %v501 = vmax.f32 %v496, 0.0
    %v502 = vpack.c.bf16 %v500, %v498
    %v503 = vpack.c.bf16 %v501, %v499
    %504 = vmatprep.subr.bf16.mxu0 %v406
    %505 = vmatpush1.bf16.msra.mxu0 %v405
    %506 = vmatprep.subr.bf16.mxu0 %v404
    %507 = vmatpush1.bf16.msra.mxu0 %v403
    %508 = vmatprep.subr.bf16.mxu0 %v402
    %509 = vmatpush1.bf16.msra.mxu0 %v401
    %510 = vmatprep.subr.bf16.mxu0 %v400
    %511 = vmatpush1.bf16.msra.mxu0 %v399
    %512 = vmatprep.subr.bf16.mxu0 %v398
    %513 = vmatpush1.bf16.msra.mxu0 %v397
    %514 = vmatprep.subr.bf16.mxu0 %v396
    %515 = vmatpush1.bf16.msra.mxu0 %v395
    %516 = vmatprep.subr.bf16.mxu0 %v394
    %517 = vmatpush1.bf16.msra.mxu0 %v393
    %518 = vmatprep.subr.bf16.mxu0 %v392
    %519 = vmatpush1.bf16.msra.mxu0 %v391
    %520 = vmatprep.subr.bf16.mxu0 %v422
    %521 = vmatpush2.bf16.msra.mxu0 %v421
    %522 = vmatprep.subr.bf16.mxu0 %v420
    %523 = vmatpush2.bf16.msra.mxu0 %v419
    %524 = vmatprep.subr.bf16.mxu0 %v418
    %525 = vmatpush2.bf16.msra.mxu0 %v417
    %526 = vmatprep.subr.bf16.mxu0 %v416
    %527 = vmatpush2.bf16.msra.mxu0 %v415
    %528 = vmatprep.subr.bf16.mxu0 %v414
    %529 = vmatpush2.bf16.msra.mxu0 %v413
    %530 = vmatprep.subr.bf16.mxu0 %v412
    %531 = vmatpush2.bf16.msra.mxu0 %v411
    %532 = vmatprep.subr.bf16.mxu0 %v410
    %533 = vmatpush2.bf16.msra.mxu0 %v409
    %534 = vmatprep.subr.bf16.mxu0 %v408
    %535 = vmatpush2.bf16.msra.mxu0 %v407
    %536 = vmatprep.mubr.bf16.mxu0 %v294
    %537 = vmatmul.mubr.bf16.gmra.mxu0 %v293
    %v538 = vpop.f32.mrf.mxu0
    %v539 = vadd.f32 0.0, %v538
    %v540 = vpop.f32.mrf.mxu0
    %v541 = vadd.f32 0.0, %v540
    %v542 = vpop.f32.mrf.mxu0
    %v543 = vadd.f32 0.0, %v542
    %v544 = vpop.f32.mrf.mxu0
    %v545 = vadd.f32 0.0, %v544
    %546 = vdwg.mxu0
    %v547 = vmax.f32 %v539, 0.0
    %v548 = vmax.f32 %v541, 0.0
    %v549 = vmax.f32 %v543, 0.0
    %v550 = vmax.f32 %v545, 0.0
    %v551 = vpack.c.bf16 %v549, %v547
    %v552 = vpack.c.bf16 %v550, %v548
    %v617 = vunpack.c.l.b16 %v86
    %v618 = vunpack.c.l.b16 %v87
    %v619 = vunpack.c.l.b16 %v88
    %v620 = vunpack.c.l.b16 %v89
    %v621 = vunpack.c.l.b16 %v90
    %v622 = vunpack.c.l.b16 %v91
    %v623 = vunpack.c.l.b16 %v92
    %v624 = vunpack.c.l.b16 %v93
    %v625 = vunpack.c.l.b16 %v94
    %v626 = vunpack.c.l.b16 %v95
    %v627 = vunpack.c.l.b16 %v96
    %v628 = vunpack.c.l.b16 %v97
    %v629 = vunpack.c.l.b16 %v98
    %v630 = vunpack.c.l.b16 %v99
    %v631 = vunpack.c.l.b16 %v100
    %v632 = vunpack.c.l.b16 %v101
    %v633 = vunpack.c.l.b16 %v102
    %v634 = vunpack.c.l.b16 %v103
    %v635 = vunpack.c.l.b16 %v104
    %v636 = vunpack.c.l.b16 %v105
    %v637 = vunpack.c.l.b16 %v106
    %v638 = vunpack.c.l.b16 %v107
    %v639 = vunpack.c.l.b16 %v108
    %v640 = vunpack.c.l.b16 %v109
    %v641 = vunpack.c.l.b16 %v110
    %v642 = vunpack.c.l.b16 %v111
    %v643 = vunpack.c.l.b16 %v112
    %v644 = vunpack.c.l.b16 %v113
    %v645 = vunpack.c.l.b16 %v114
    %v646 = vunpack.c.l.b16 %v115
    %v647 = vunpack.c.l.b16 %v116
    %v648 = vunpack.c.l.b16 %v117
    %v649 = vunpack.c.l.b16 %v118
    %v650 = vunpack.c.l.b16 %v119
    %v651 = vunpack.c.l.b16 %v120
    %v652 = vunpack.c.l.b16 %v121
    %v653 = vunpack.c.l.b16 %v122
    %v654 = vunpack.c.l.b16 %v123
    %v655 = vunpack.c.l.b16 %v124
    %v656 = vunpack.c.l.b16 %v125
    %v657 = vunpack.c.l.b16 %v126
    %v658 = vunpack.c.l.b16 %v127
    %v659 = vunpack.c.l.b16 %v128
    %v660 = vunpack.c.l.b16 %v129
    %v661 = vunpack.c.l.b16 %v130
    %v662 = vunpack.c.l.b16 %v131
    %v663 = vunpack.c.l.b16 %v132
    %v664 = vunpack.c.l.b16 %v133
    %v665 = vunpack.c.l.b16 %v134
    %v666 = vunpack.c.l.b16 %v135
    %v667 = vunpack.c.l.b16 %v136
    %v668 = vunpack.c.l.b16 %v137
    %v669 = vunpack.c.l.b16 %v138
    %v670 = vunpack.c.l.b16 %v139
    %v671 = vunpack.c.l.b16 %v140
    %v672 = vunpack.c.l.b16 %v141
    %v673 = vunpack.c.l.b16 %v142
    %v674 = vunpack.c.l.b16 %v143
    %v675 = vunpack.c.l.b16 %v144
    %v676 = vunpack.c.l.b16 %v145
    %v677 = vunpack.c.l.b16 %v146
    %v678 = vunpack.c.l.b16 %v147
    %v679 = vunpack.c.l.b16 %v148
    %v680 = vunpack.c.l.b16 %v149
    %v681 = vpack.c.b16 %v618, %v617
    %v682 = vpack.c.b16 %v620, %v619
    %v683 = vpack.c.b16 %v622, %v621
    %v684 = vpack.c.b16 %v624, %v623
    %v685 = vpack.c.b16 %v626, %v625
    %v686 = vpack.c.b16 %v628, %v627
    %v687 = vpack.c.b16 %v630, %v629
    %v688 = vpack.c.b16 %v632, %v631
    %v689 = vpack.c.b16 %v634, %v633
    %v690 = vpack.c.b16 %v636, %v635
    %v691 = vpack.c.b16 %v638, %v637
    %v692 = vpack.c.b16 %v640, %v639
    %v693 = vpack.c.b16 %v642, %v641
    %v694 = vpack.c.b16 %v644, %v643
    %v695 = vpack.c.b16 %v646, %v645
    %v696 = vpack.c.b16 %v648, %v647
    %v697 = vpack.c.b16 %v650, %v649
    %v698 = vpack.c.b16 %v652, %v651
    %v699 = vpack.c.b16 %v654, %v653
    %v700 = vpack.c.b16 %v656, %v655
    %v701 = vpack.c.b16 %v658, %v657
    %v702 = vpack.c.b16 %v660, %v659
    %v703 = vpack.c.b16 %v662, %v661
    %v704 = vpack.c.b16 %v664, %v663
    %v705 = vpack.c.b16 %v666, %v665
    %v706 = vpack.c.b16 %v668, %v667
    %v707 = vpack.c.b16 %v670, %v669
    %v708 = vpack.c.b16 %v672, %v671
    %v709 = vpack.c.b16 %v674, %v673
    %v710 = vpack.c.b16 %v676, %v675
    %v711 = vpack.c.b16 %v678, %v677
    %v712 = vpack.c.b16 %v680, %v679
    %745 = vmatprep.subr.bf16.mxu0 0
    %746 = vmatpush1.bf16.msra.mxu0 %v688
    %747 = vmatprep.subr.bf16.mxu0 0
    %748 = vmatpush1.bf16.msra.mxu0 %v687
    %749 = vmatprep.subr.bf16.mxu0 0
    %750 = vmatpush1.bf16.msra.mxu0 %v686
    %751 = vmatprep.subr.bf16.mxu0 0
    %752 = vmatpush1.bf16.msra.mxu0 %v685
    %753 = vmatprep.subr.bf16.mxu0 0
    %754 = vmatpush1.bf16.msra.mxu0 %v684
    %755 = vmatprep.subr.bf16.mxu0 0
    %756 = vmatpush1.bf16.msra.mxu0 %v683
    %757 = vmatprep.subr.bf16.mxu0 0
    %758 = vmatpush1.bf16.msra.mxu0 %v682
    %759 = vmatprep.subr.bf16.mxu0 0
    %760 = vmatpush1.bf16.msra.mxu0 %v681
    %761 = vmatprep.subr.bf16.mxu0 0
    %762 = vmatpush2.bf16.msra.mxu0 %v696
    %763 = vmatprep.subr.bf16.mxu0 0
    %764 = vmatpush2.bf16.msra.mxu0 %v695
    %765 = vmatprep.subr.bf16.mxu0 0
    %766 = vmatpush2.bf16.msra.mxu0 %v694
    %767 = vmatprep.subr.bf16.mxu0 0
    %768 = vmatpush2.bf16.msra.mxu0 %v693
    %769 = vmatprep.subr.bf16.mxu0 0
    %770 = vmatpush2.bf16.msra.mxu0 %v692
    %771 = vmatprep.subr.bf16.mxu0 0
    %772 = vmatpush2.bf16.msra.mxu0 %v691
    %773 = vmatprep.subr.bf16.mxu0 0
    %774 = vmatpush2.bf16.msra.mxu0 %v690
    %775 = vmatprep.subr.bf16.mxu0 0
    %776 = vmatpush2.bf16.msra.mxu0 %v689
    %777 = vmatprep.mubr.bf16.mxu0 %v503
    %778 = vmatmul.mubr.bf16.gmra.mxu0 %v502
    %v779 = vpop.f32.mrf.mxu0
    %v780 = vadd.f32 0.0, %v779
    %v781 = vpop.f32.mrf.mxu0
    %v782 = vpop.f32.mrf.mxu0
    %v783 = vadd.f32 0.0, %v782
    %v784 = vpop.f32.mrf.mxu0
    %785 = vdwg.mxu0
    %786 = vmatprep.subr.bf16.mxu0 0
    %787 = vmatpush1.bf16.msra.mxu0 %v704
    %788 = vmatprep.subr.bf16.mxu0 0
    %789 = vmatpush1.bf16.msra.mxu0 %v703
    %790 = vmatprep.subr.bf16.mxu0 0
    %791 = vmatpush1.bf16.msra.mxu0 %v702
    %792 = vmatprep.subr.bf16.mxu0 0
    %793 = vmatpush1.bf16.msra.mxu0 %v701
    %794 = vmatprep.subr.bf16.mxu0 0
    %795 = vmatpush1.bf16.msra.mxu0 %v700
    %796 = vmatprep.subr.bf16.mxu0 0
    %797 = vmatpush1.bf16.msra.mxu0 %v699
    %798 = vmatprep.subr.bf16.mxu0 0
    %799 = vmatpush1.bf16.msra.mxu0 %v698
    %800 = vmatprep.subr.bf16.mxu0 0
    %801 = vmatpush1.bf16.msra.mxu0 %v697
    %802 = vmatprep.subr.bf16.mxu0 0
    %803 = vmatpush2.bf16.msra.mxu0 %v712
    %804 = vmatprep.subr.bf16.mxu0 0
    %805 = vmatpush2.bf16.msra.mxu0 %v711
    %806 = vmatprep.subr.bf16.mxu0 0
    %807 = vmatpush2.bf16.msra.mxu0 %v710
    %808 = vmatprep.subr.bf16.mxu0 0
    %809 = vmatpush2.bf16.msra.mxu0 %v709
    %810 = vmatprep.subr.bf16.mxu0 0
    %811 = vmatpush2.bf16.msra.mxu0 %v708
    %812 = vmatprep.subr.bf16.mxu0 0
    %813 = vmatpush2.bf16.msra.mxu0 %v707
    %814 = vmatprep.subr.bf16.mxu0 0
    %815 = vmatpush2.bf16.msra.mxu0 %v706
    %816 = vmatprep.subr.bf16.mxu0 0
    %817 = vmatpush2.bf16.msra.mxu0 %v705
    %818 = vmatprep.mubr.bf16.mxu0 %v552
    %819 = vmatmul.mubr.bf16.gmra.mxu0 %v551
    %v820 = vpop.f32.mrf.mxu0
    %v821 = vadd.f32 %v780, %v820
    %v822 = vpop.f32.mrf.mxu0
    %v823 = vpop.f32.mrf.mxu0
    %v824 = vadd.f32 %v783, %v823
    %v825 = vpop.f32.mrf.mxu0
    %826 = vdwg.mxu0
    %827 = vst [vmem:[%s4] sm:$0xff] %v821
    %828 = vst [vmem:[%s4 + $0x8] sm:$0xff] %v824
    // Predicated region
    $region26: #{_forward_impl.1} parent=1 // pred_check
      _
    $region27: #{_forward_impl.1} parent=1 // pred_check_branch
      %830 = sbr.rel (0) target = $region29
    $region28: #{_forward_impl.1} parent=1 // pred_region
      _
    $region29: #{_forward_impl.1} parent=1 // pred_fallthru
      _
    // Predicated region
    $region30: #{_forward_impl.1} parent=1 // pred_check
      _
    $region31: #{_forward_impl.1} parent=1 // pred_check_branch
      %832 = sbr.rel (0) target = $region33
    $region32: #{_forward_impl.1} parent=1 // pred_region
      _
    $region33: #{_forward_impl.1} parent=1 // pred_fallthru
      _
    %833 = vsyncpa [#allocation3], 1
    %834 = vsyncpa [#allocation5], 1

</llo_original>
